<compile_context>
chip_gen: v7x
topology: tpu7x:2x2x1
jax: 0.10.0
libtpu: 0.0.40
codegen_flags: <defaults>
</compile_context>

<pallas_src>
import functools

import jax
import jax.numpy as jnp
from jax.experimental import pallas as pl
from jax.experimental.pallas import tpu as pltpu


def _round_up(x: int, m: int) -> int:
    return ((x + m - 1) // m) * m


def _vmem_capacity_bytes() -> int:
    """Physical VMEM per core; falls back to 128 MiB if the query is unavailable."""
    try:
        info = pltpu.get_tpu_info()
        cap = getattr(info, "vmem_capacity_bytes", None)
        if cap:
            return int(cap)
    except Exception:
        pass
    return 128 << 20


def _pick_ffn_tile(expert_size: int, target: int) -> int:
    """FFN chunk size: full expert_size if it fits, else the largest divisor that is a
    multiple of 256 (preferred: v6e/v7x MXU is 256x256) or 128."""
    if expert_size <= target:
        return expert_size
    for step in (256, 128):
        t = (target // step) * step
        while t >= step:
            if expert_size % t == 0:
                return t
            t -= step
    # TODO(synk): pad expert_size to a multiple of 256 instead of falling back to full size.
    return expert_size


def _moe_vmem_estimate(tm: int, tf: int, d_model: int,
                       compute_bytes: int, out_bytes: int) -> int:
    """Double-buffered inputs + f32 accumulator scratch + output block."""
    return (2 * tm * d_model * compute_bytes      # x tile
            + 2 * d_model * tf * compute_bytes    # Wk chunk
            + 2 * tf * d_model * compute_bytes    # Wv chunk
            + 2 * tm * 4                          # gate column (f32)
            + tm * d_model * 4                    # f32 accumulator scratch
            + 2 * tm * d_model * out_bytes)       # output block (+ writeback buffer)


# ---------------------------------------------------------------------------
# Kernel 1: router  sel = sigmoid(X @ Wsel)   (token-tiled, lane-dense f32 output)
# ---------------------------------------------------------------------------
def _router_kernel(x_ref, wsel_ref, sel_ref):
    logits = jnp.dot(x_ref[...], wsel_ref[...], preferred_element_type=jnp.float32)
    sel_ref[...] = jax.nn.sigmoid(logits)


def _router(x_pad, wsel_pad, *, tm, vmem_budget):
    T_pad, D = x_pad.shape
    E_pad = wsel_pad.shape[1]
    n_t = T_pad // tm
    rbytes = jnp.dtype(x_pad.dtype).itemsize
    vmem_est = (2 * tm * D * rbytes           # x tile
                + 2 * D * E_pad * rbytes      # Wsel (resident, budget 2x to be safe)
                + 2 * tm * E_pad * 4)         # f32 output block
    vmem_limit = int(min(max(int(vmem_est * 1.4) + (1 << 20), 8 << 20), vmem_budget))
    return pl.pallas_call(
        _router_kernel,
        out_shape=jax.ShapeDtypeStruct((T_pad, E_pad), jnp.float32),
        grid_spec=pltpu.PrefetchScalarGridSpec(
            num_scalar_prefetch=0,
            grid=(n_t,),
            in_specs=[
                pl.BlockSpec((tm, D), lambda t: (t, 0)),
                pl.BlockSpec((D, E_pad), lambda t: (0, 0)),
            ],
            out_specs=pl.BlockSpec((tm, E_pad), lambda t: (t, 0)),
        ),
        compiler_params=pltpu.CompilerParams(
            dimension_semantics=("parallel",),
            vmem_limit_bytes=vmem_limit,
        ),
    )(x_pad, wsel_pad)


# ---------------------------------------------------------------------------
# Kernel 2: expert mix
#   grid = (token tiles [parallel], FFN chunks [arbitrary], active-expert slots [arbitrary])
#   acc[t_tile] += gate[:, e] * relu(X @ Wk[e][:, chunk]) @ Wv[e][chunk, :]
#   Slot s maps to a compacted active expert id (scalar-prefetched).  For s >= count the id
#   repeats the last active expert, so the Wk/Wv/gate block indices do not change and Pallas
#   issues no new weight DMA; the pl.when guard skips the MXU work.
# ---------------------------------------------------------------------------
def _moe_kernel(ids_ref, cnt_ref, x_ref, wk_ref, wv_ref, gate_ref, o_ref, acc_ref):
    t = pl.program_id(0)
    f = pl.program_id(1)
    s = pl.program_id(2)

    @pl.when((f == 0) & (s == 0))
    def _init():
        acc_ref[...] = jnp.zeros_like(acc_ref)

    @pl.when(s < cnt_ref[t])
    def _compute():
        # (tm, tf) = relu(X @ Wk[e][:, chunk]); relu is elementwise so chunking is exact.
        scores = jnp.dot(x_ref[...], wk_ref[0], preferred_element_type=jnp.float32)
        scores = jnp.maximum(scores, 0.0)
        # Fold the gate into the smaller (tm, tf) operand, cast to the MXU compute dtype.
        gated = (gate_ref[0] * scores).astype(wv_ref.dtype)
        acc_ref[...] += jnp.dot(gated, wv_ref[0], preferred_element_type=jnp.float32)

    @pl.when((f == pl.num_programs(1) - 1) & (s == pl.num_programs(2) - 1))
    def _finalize():
        o_ref[...] = acc_ref[...].astype(o_ref.dtype)


def _moe_mix(ids_flat, counts, x_c, wk_cm, wv_c, gate_ext, *, tm, tf, n_slots,
             n_heads, out_dtype, vmem_budget):
    T_pad, D = x_c.shape
    n_experts, expert_size, _ = wv_c.shape
    n_t = T_pad // tm
    n_f = expert_size // tf
    cbytes = jnp.dtype(x_c.dtype).itemsize
    obytes = jnp.dtype(out_dtype).itemsize

    vmem_est = _moe_vmem_estimate(tm, tf, D, cbytes, obytes)
    vmem_limit = int(min(max(int(vmem_est * 1.4) + (1 << 20), 16 << 20), vmem_budget))

    cost = pl.CostEstimate(
        flops=4 * T_pad * D * expert_size * n_heads,          # ~k active experts / token
        transcendentals=0,
        bytes_accessed=(T_pad * D * cbytes
                        + n_t * n_slots * 2 * D * expert_size * cbytes
                        + T_pad * n_experts * 4
                        + T_pad * D * obytes),
    )

    def _x_map(t, f, s, ids, cnt):
        return (t, 0)

    def _wk_map(t, f, s, ids, cnt):
        return (ids[t * n_slots + s] * n_f + f, 0, 0)

    def _wv_map(t, f, s, ids, cnt):
        return (ids[t * n_slots + s], f, 0)

    def _gate_map(t, f, s, ids, cnt):
        return (ids[t * n_slots + s], t, 0)

    def _out_map(t, f, s, ids, cnt):
        return (t, 0)

    return pl.pallas_call(
        _moe_kernel,
        out_shape=jax.ShapeDtypeStruct((T_pad, D), out_dtype),
        grid_spec=pltpu.PrefetchScalarGridSpec(
            num_scalar_prefetch=2,                         # ids_flat, counts -> SMEM
            grid=(n_t, n_f, n_slots),
            in_specs=[
                pl.BlockSpec((tm, D), _x_map),
                pl.BlockSpec((1, D, tf), _wk_map),         # contiguous chunk-major Wk
                pl.BlockSpec((1, tf, D), _wv_map),
                pl.BlockSpec((1, tm, 1), _gate_map),
            ],
            out_specs=pl.BlockSpec((tm, D), _out_map),
            scratch_shapes=[pltpu.VMEM((tm, D), jnp.float32)],
        ),
        compiler_params=pltpu.CompilerParams(
            dimension_semantics=("parallel", "arbitrary", "arbitrary"),
            vmem_limit_bytes=vmem_limit,
        ),
        cost_estimate=cost,
    )(ids_flat, counts, x_c, wk_cm, wv_c, gate_ext)


# ---------------------------------------------------------------------------
# Full forward (matches SigmaMoELayer.forward).  Weights are consumed in the dtype they
# are passed in (pass bf16 weights for bf16 MXU compute; no per-call weight casts here).
# ---------------------------------------------------------------------------
@functools.partial(jax.jit, static_argnames=("n_heads", "block_tokens", "block_ffn"))
def sigma_moe_forward(x, wsel_t, wk_t, wv_t, n_heads, block_tokens=None, block_ffn=None):
    bsz, seq_len, d_model = x.shape
    n_experts = wsel_t.shape[1]
    expert_size = wk_t.shape[2]
    T = bsz * seq_len

    # --- chip-aware tiling / VMEM budget (static, trace-time) ---
    vmem_cap_total = _vmem_capacity_bytes()
    vmem_budget = (vmem_cap_total * 3) // 4        # 48 MiB on v7x, 96 MiB on v5e/v6e
    if block_tokens is None:
        block_tokens = 256 if vmem_cap_total <= (80 << 20) else 1024
    if block_ffn is None:
        block_ffn = 512

    tm = min(block_tokens, _round_up(T, 8))
    tm = max(8, (tm // 8) * 8)
    # Prefer >= 2 token tiles so megacore / v7x's second TensorCore gets work.
    if -(-T // tm) < 2 and tm > 8:
        tm = max(8, _round_up(tm // 2, 8))
    tf = _pick_ffn_tile(expert_size, block_ffn)

    wbytes = jnp.dtype(wk_t.dtype).itemsize
    obytes = jnp.dtype(x.dtype).itemsize
    # Prefer shrinking the token tile over clamping the VMEM limit.
    while _moe_vmem_estimate(tm, tf, d_model, wbytes, obytes) > vmem_budget and tm > 64:
        tm = max(64, _round_up(tm // 2, 8))

    T_pad = _round_up(T, tm)
    n_t = T_pad // tm
    n_f = expert_size // tf
    n_slots = min(n_experts, tm * n_heads)         # max possible active experts per tile
    E_pad = _round_up(n_experts, 128)              # lane-dense router output

    x_flat = x.reshape(T, d_model)
    x_pad = jnp.pad(x_flat, ((0, T_pad - T), (0, 0)))

    # --- router: matmul in wsel dtype (bf16 recommended on v6e/v7x), f32 acc + sigmoid ---
    wsel_pad = jnp.pad(wsel_t, ((0, 0), (0, E_pad - n_experts)))
    sel = _router(x_pad.astype(wsel_t.dtype), wsel_pad, tm=tm, vmem_budget=vmem_budget)
    sel = sel[:T, :n_experts]

    sel_val, sel_idx = jax.lax.top_k(sel, n_heads)                 # (T, k)

    # per-token per-expert gates via scatter-add (top-k ids are distinct -> exact)
    rows = jnp.arange(T)
    gate = jnp.zeros((T_pad, n_experts), jnp.float32).at[
        rows[:, None], sel_idx].add(sel_val)                       # padded rows stay 0

    # --- per-tile compacted active-expert ids (+counts) for the DMA/compute skip ---
    # Tokens whose sigmoid gate underflows to exactly 0.0 are treated as inactive; their
    # contribution is exactly zero anyway, so this is benign.
    act_te = (gate.reshape(n_t, tm, n_experts) > 0.0).any(axis=1)          # (n_t, E)
    counts = act_te.sum(axis=1).astype(jnp.int32)                          # (n_t,)
    order = jnp.argsort(jnp.logical_not(act_te).astype(jnp.int32),
                        axis=1).astype(jnp.int32)                          # active ids first
    slot = jnp.arange(n_slots, dtype=jnp.int32)
    clamp = jnp.minimum(slot[None, :], jnp.maximum(counts[:, None] - 1, 0))
    ids_flat = jnp.take_along_axis(order, clamp, axis=1).reshape(-1)       # flat 1-D SMEM

    # gate columns delivered by BlockSpec as (E, T_pad, 1)
    gate_ext = jnp.transpose(gate)[:, :, None]

    # --- Wk chunk-major layout: each (D, tf) chunk is one contiguous DMA ---
    # TODO(synk): in production store Wk pre-laid-out chunk-major (and pre-cast) so this
    # relayout is not redone per call; with tf == expert_size it is a no-op already.
    if n_f > 1:
        wk_cm = wk_t.reshape(n_experts, d_model, n_f, tf).transpose(0, 2, 1, 3)
        wk_cm = wk_cm.reshape(n_experts * n_f, d_model, tf)
    else:
        wk_cm = wk_t                                                       # (E, D, expert_size)

    # --- expert mix: weights in given dtype, x cast once, f32 accumulation, x.dtype out ---
    x_mix = x_pad.astype(wk_t.dtype)
    out_pad = _moe_mix(ids_flat, counts, x_mix, wk_cm, wv_t, gate_ext,
                       tm=tm, tf=tf, n_slots=n_slots, n_heads=n_heads,
                       out_dtype=x.dtype, vmem_budget=vmem_budget)

    out = out_pad[:T].reshape(bsz, seq_len, d_model)
    # TODO(synk): aux loss is hardcoded 0.0 exactly like the PyTorch module's forward.
    return out, 0.0


# ---------------------------------------------------------------------------
# Pure-JAX reference (mirrors the PyTorch naive loops, vectorized).  router_dtype lets the
# reference use the same routing precision as the kernel so top-k decisions match.
# ---------------------------------------------------------------------------
def reference_forward(x, wsel_t, wk_t, wv_t, n_heads, router_dtype=jnp.float32):
    bsz, seq_len, d_model = x.shape
    x_flat = x.reshape(-1, d_model)
    logits = jnp.dot(x_flat.astype(router_dtype), wsel_t.astype(router_dtype),
                     preferred_element_type=jnp.float32)
    sel = jax.nn.sigmoid(logits)
    sel_val, sel_idx = jax.lax.top_k(sel, n_heads)
    xf = x_flat.astype(jnp.float32)
    wk = wk_t.astype(jnp.float32)
    wv = wv_t.astype(jnp.float32)
    res = jnp.zeros_like(xf)
    for h in range(n_heads):
        wk_g = wk[sel_idx[:, h]]                      # (T, D, E)
        wv_g = wv[sel_idx[:, h]]                      # (T, E, D)
        scores = jnp.maximum(jnp.einsum("td,tde->te", xf, wk_g), 0.0)
        res = res + sel_val[:, h:h + 1] * jnp.einsum("te,ted->td", scores, wv_g)
    return res.reshape(bsz, seq_len, d_model).astype(x.dtype), 0.0


if __name__ == "__main__":
    # Small shapes consistent with the module
    bsz, seq_len = 2, 8
    d_model, n_experts, expert_size, k = 32, 4, 64, 2

    key = jax.random.PRNGKey(0)
    kx, ksel, kk, kv = jax.random.split(key, 4)

    lim_sel = 1.0 / (d_model ** 0.5)
    lim_key = 1.0 / (d_model ** 0.5)
    lim_val = 1.0 / (expert_size ** 0.5)
    # stored pre-transposed for row-major matmuls in the kernels
    wsel_t = jax.random.uniform(ksel, (d_model, n_experts), jnp.float32, -lim_sel, lim_sel)
    wk_t = jax.random.uniform(kk, (n_experts, d_model, expert_size), jnp.float32, -lim_key, lim_key)
    wv_t = jax.random.uniform(kv, (n_experts, expert_size, d_model), jnp.float32, -lim_val, lim_val)
    x = jax.random.normal(kx, (bsz, seq_len, d_model), jnp.float32)

    # 1) f32 weights -> f32 MXU path: tight structural check vs the f32 reference.
    ref32, _ = reference_forward(x, wsel_t, wk_t, wv_t, k, router_dtype=jnp.float32)
    out32, _ = sigma_moe_forward(x, wsel_t, wk_t, wv_t, k)
    out32 = jax.block_until_ready(out32)
    assert out32.shape == (bsz, seq_len, d_model)
    assert jnp.allclose(out32, ref32, atol=1e-4, rtol=1e-4), "f32 kernel mismatch vs reference"

    # 2) bf16 weights (pre-cast ONCE outside the forward, per review): bf16 MXU inputs with
    #    f32 accumulation.  Reference uses the same bf16 weights and a bf16-precision router
    #    so routing decisions match; tolerance covers bf16 activation rounding.
    wsel_b = wsel_t.astype(jnp.bfloat16)
    wk_b = wk_t.astype(jnp.bfloat16)
    wv_b = wv_t.astype(jnp.bfloat16)
    refb, _ = reference_forward(x, wsel_b, wk_b, wv_b, k, router_dtype=jnp.bfloat16)
    outb, _ = sigma_moe_forward(x, wsel_b, wk_b, wv_b, k)
    outb = jax.block_until_ready(outb)
    assert outb.shape == (bsz, seq_len, d_model)
    assert jnp.allclose(outb, refb, atol=3e-2, rtol=3e-2), "bf16 kernel mismatch vs reference"

    print("KERNEL_OK")
</pallas_src>

<mosaic_0001>
module attributes {stable_mosaic.version = 11 : i64} {
  func.func private @main(%arg0: i32) attributes {dimension_semantics = [#tpu.dimension_semantics<core_parallel>], iteration_bounds = array<i64: 2>, tpu.core_type = #tpu.core_type<sc_scalar_subcore>, window_params = []} {
    return
  }
}

module attributes {stable_mosaic.version = 11 : i64} {
  func.func private @main(%arg0: i32) attributes {dimension_semantics = [#tpu.dimension_semantics<core_parallel>], iteration_bounds = array<i64: 2>, tpu.core_type = #tpu.core_type<sc_scalar_subcore>, window_params = []} {
    return
  }
}

module attributes {stable_mosaic.version = 11 : i64} {
  func.func @_router_kernel(%arg0: i32, %arg1: memref<8x32xf32, #tpu.memory_space<vmem>>, %arg2: memref<32x128xf32, #tpu.memory_space<vmem>>, %arg3: memref<8x128xf32, #tpu.memory_space<vmem>>) attributes {dimension_semantics = [#tpu.dimension_semantics<parallel>], iteration_bounds = array<i64: 2>, scalar_prefetch = 0 : i64, scratch_operands = 0 : i64, tpu.core_type = #tpu.core_type<tc>, window_params = [{transform_indices = @transform_0, window_bounds = array<i64: 8, 32>}, {pipeline_mode = #tpu.pipeline_mode<synchronous>, transform_indices = @transform_1, window_bounds = array<i64: 32, 128>}, {transform_indices = @transform_2, window_bounds = array<i64: 8, 128>}]} {
    %c0 = arith.constant 0 : index
    %c0_0 = arith.constant 0 : index
    %0 = vector.load %arg1[%c0, %c0_0] : memref<8x32xf32, #tpu.memory_space<vmem>>, vector<8x32xf32>
    %c0_1 = arith.constant 0 : index
    %c0_2 = arith.constant 0 : index
    %1 = vector.load %arg2[%c0_1, %c0_2] : memref<32x128xf32, #tpu.memory_space<vmem>>, vector<32x128xf32>
    %cst = arith.constant dense<0.000000e+00> : vector<8x128xf32>
    %2 = tpu.matmul %0, %1, %cst {dimension_numbers = #tpu.dot_dimension_numbers<[1], [0], [0], [1], [0, 0, 1, 1], [], []>} : vector<8x32xf32>, vector<32x128xf32>, vector<8x128xf32> -> vector<8x128xf32>
    %3 = arith.negf %2 : vector<8x128xf32>
    %4 = math.exp %3 : vector<8x128xf32>
    %cst_3 = arith.constant 1.000000e+00 : f32
    %5 = vector.broadcast %cst_3 : f32 to vector<8x128xf32>
    %6 = arith.addf %5, %4 : vector<8x128xf32>
    %7 = arith.divf %5, %6 : vector<8x128xf32>
    %c0_4 = arith.constant 0 : index
    %c0_5 = arith.constant 0 : index
    %8 = vector.load %arg3[%c0_4, %c0_5] : memref<8x128xf32, #tpu.memory_space<vmem>>, vector<8x128xf32>
    tpu.vector_store %arg3[%c0_4, %c0_5], %7 {strides = array<i32>} : memref<8x128xf32, #tpu.memory_space<vmem>>, vector<8x128xf32>,
    return
  }
  func.func @transform_0(%arg0: i32) -> (i32, i32) {
    %c0_i32 = arith.constant 0 : i32
    %c0_i32_0 = arith.constant 0 : i32
    return %arg0, %c0_i32 : i32, i32
  }
  func.func @transform_1(%arg0: i32) -> (i32, i32) {
    %c0_i32 = arith.constant 0 : i32
    %c0_i32_0 = arith.constant 0 : i32
    %c0_i32_1 = arith.constant 0 : i32
    return %c0_i32, %c0_i32_0 : i32, i32
  }
  func.func @transform_2(%arg0: i32) -> (i32, i32) {
    %c0_i32 = arith.constant 0 : i32
    %c0_i32_0 = arith.constant 0 : i32
    return %arg0, %c0_i32 : i32, i32
  }
}

module attributes {stable_mosaic.version = 11 : i64} {
  func.func @_moe_kernel(%arg0: i32, %arg1: i32, %arg2: i32, %arg3: memref<8xi32, #tpu.memory_space<smem>>, %arg4: memref<2xi32, #tpu.memory_space<smem>>, %arg5: memref<8x32xf32, #tpu.memory_space<vmem>>, %arg6: memref<1x32x64xf32, #tpu.memory_space<vmem>>, %arg7: memref<1x64x32xf32, #tpu.memory_space<vmem>>, %arg8: memref<1x8x1xf32, #tpu.memory_space<vmem>>, %arg9: memref<8x32xf32, #tpu.memory_space<vmem>>, %arg10: memref<8x32xf32, #tpu.memory_space<vmem>>) attributes {dimension_semantics = [#tpu.dimension_semantics<parallel>, #tpu.dimension_semantics<arbitrary>, #tpu.dimension_semantics<arbitrary>], iteration_bounds = array<i64: 2, 1, 4>, scalar_prefetch = 2 : i64, scratch_operands = 1 : i64, tpu.core_type = #tpu.core_type<tc>, window_params = [{transform_indices = @transform_0, window_bounds = array<i64: 8, 32>}, {transform_indices = @transform_1, window_bounds = array<i64: 1, 32, 64>}, {transform_indices = @transform_2, window_bounds = array<i64: 1, 64, 32>}, {transform_indices = @transform_3, window_bounds = array<i64: 1, 8, 1>}, {transform_indices = @transform_4, window_bounds = array<i64: 8, 32>}]} {
    %c0_i32 = arith.constant 0 : i32
    %0 = arith.cmpi eq, %arg1, %c0_i32 : i32
    %c0_i32_0 = arith.constant 0 : i32
    %1 = arith.cmpi eq, %arg2, %c0_i32_0 : i32
    %2 = arith.andi %0, %1 : i1
    %3 = arith.extui %2 : i1 to i32
    %c0_i32_1 = arith.constant 0 : i32
    %4 = arith.cmpi ne, %3, %c0_i32_1 : i32
    scf.if %4 {
      %cst = arith.constant 0.000000e+00 : f32
      %15 = vector.broadcast %cst : f32 to vector<8x32xf32>
      %c0 = arith.constant 0 : index
      %c0_5 = arith.constant 0 : index
      %16 = vector.load %arg10[%c0, %c0_5] : memref<8x32xf32, #tpu.memory_space<vmem>>, vector<8x32xf32>
      tpu.vector_store %arg10[%c0, %c0_5], %15 {strides = array<i32>} : memref<8x32xf32, #tpu.memory_space<vmem>>, vector<8x32xf32>,
    } else {
    }
    %5 = arith.index_cast %arg0 : i32 to index
    %6 = memref.load %arg4[%5] : memref<2xi32, #tpu.memory_space<smem>>
    %7 = arith.cmpi slt, %arg2, %6 : i32
    %8 = arith.extui %7 : i1 to i32
    %c0_i32_2 = arith.constant 0 : i32
    %9 = arith.cmpi ne, %8, %c0_i32_2 : i32
    scf.if %9 {
      %c0 = arith.constant 0 : index
      %c0_5 = arith.constant 0 : index
      %15 = vector.load %arg5[%c0, %c0_5] : memref<8x32xf32, #tpu.memory_space<vmem>>, vector<8x32xf32>
      %c0_6 = arith.constant 0 : index
      %c0_7 = arith.constant 0 : index
      %c0_8 = arith.constant 0 : index
      %16 = vector.load %arg6[%c0_6, %c0_7, %c0_8] : memref<1x32x64xf32, #tpu.memory_space<vmem>>, vector<1x32x64xf32>
      %17 = vector.shape_cast %16 : vector<1x32x64xf32> to vector<32x64xf32>
      %cst = arith.constant dense<0.000000e+00> : vector<8x64xf32>
      %18 = tpu.matmul %15, %17, %cst {dimension_numbers = #tpu.dot_dimension_numbers<[1], [0], [0], [1], [0, 0, 1, 1], [], []>} : vector<8x32xf32>, vector<32x64xf32>, vector<8x64xf32> -> vector<8x64xf32>
      %cst_9 = arith.constant 0.000000e+00 : f32
      %19 = vector.broadcast %cst_9 : f32 to vector<8x64xf32>
      %20 = arith.maximumf %18, %19 : vector<8x64xf32>
      %c0_10 = arith.constant 0 : index
      %c0_11 = arith.constant 0 : index
      %c0_12 = arith.constant 0 : index
      %21 = vector.load %arg8[%c0_10, %c0_11, %c0_12] : memref<1x8x1xf32, #tpu.memory_space<vmem>>, vector<1x8x1xf32>
      %22 = vector.shape_cast %21 : vector<1x8x1xf32> to vector<8x1xf32>
      %23 = vector.broadcast %22 : vector<8x1xf32> to vector<8x64xf32>
      %24 = arith.mulf %23, %20 : vector<8x64xf32>
      %c0_13 = arith.constant 0 : index
      %c0_14 = arith.constant 0 : index
      %25 = vector.load %arg10[%c0_13, %c0_14] : memref<8x32xf32, #tpu.memory_space<vmem>>, vector<8x32xf32>
      %c0_15 = arith.constant 0 : index
      %c0_16 = arith.constant 0 : index
      %c0_17 = arith.constant 0 : index
      %26 = vector.load %arg7[%c0_15, %c0_16, %c0_17] : memref<1x64x32xf32, #tpu.memory_space<vmem>>, vector<1x64x32xf32>
      %27 = vector.shape_cast %26 : vector<1x64x32xf32> to vector<64x32xf32>
      %cst_18 = arith.constant dense<0.000000e+00> : vector<8x32xf32>
      %28 = tpu.matmul %24, %27, %cst_18 {dimension_numbers = #tpu.dot_dimension_numbers<[1], [0], [0], [1], [0, 0, 1, 1], [], []>} : vector<8x64xf32>, vector<64x32xf32>, vector<8x32xf32> -> vector<8x32xf32>
      %29 = arith.addf %25, %28 : vector<8x32xf32>
      %c0_19 = arith.constant 0 : index
      %c0_20 = arith.constant 0 : index
      %30 = vector.load %arg10[%c0_19, %c0_20] : memref<8x32xf32, #tpu.memory_space<vmem>>, vector<8x32xf32>
      tpu.vector_store %arg10[%c0_19, %c0_20], %29 {strides = array<i32>} : memref<8x32xf32, #tpu.memory_space<vmem>>, vector<8x32xf32>,
    } else {
    }
    %c0_i32_3 = arith.constant 0 : i32
    %10 = arith.cmpi eq, %arg1, %c0_i32_3 : i32
    %c3_i32 = arith.constant 3 : i32
    %11 = arith.cmpi eq, %arg2, %c3_i32 : i32
    %12 = arith.andi %10, %11 : i1
    %13 = arith.extui %12 : i1 to i32
    %c0_i32_4 = arith.constant 0 : i32
    %14 = arith.cmpi ne, %13, %c0_i32_4 : i32
    scf.if %14 {
      %c0 = arith.constant 0 : index
      %c0_5 = arith.constant 0 : index
      %15 = vector.load %arg10[%c0, %c0_5] : memref<8x32xf32, #tpu.memory_space<vmem>>, vector<8x32xf32>
      %c0_6 = arith.constant 0 : index
      %c0_7 = arith.constant 0 : index
      %16 = vector.load %arg9[%c0_6, %c0_7] : memref<8x32xf32, #tpu.memory_space<vmem>>, vector<8x32xf32>
      tpu.vector_store %arg9[%c0_6, %c0_7], %15 {strides = array<i32>} : memref<8x32xf32, #tpu.memory_space<vmem>>, vector<8x32xf32>,
    } else {
    }
    return
  }
  func.func @transform_0(%arg0: i32, %arg1: i32, %arg2: i32, %arg3: memref<8xi32, #tpu.memory_space<smem>>, %arg4: memref<2xi32, #tpu.memory_space<smem>>) -> (i32, i32) {
    %c0_i32 = arith.constant 0 : i32
    %c0_i32_0 = arith.constant 0 : i32
    return %arg0, %c0_i32 : i32, i32
  }
  func.func @transform_1(%arg0: i32, %arg1: i32, %arg2: i32, %arg3: memref<8xi32, #tpu.memory_space<smem>>, %arg4: memref<2xi32, #tpu.memory_space<smem>>) -> (i32, i32, i32) {
    %c4_i32 = arith.constant 4 : i32
    %0 = arith.muli %arg0, %c4_i32 : i32
    %1 = arith.addi %0, %arg2 : i32
    %2 = arith.index_cast %1 : i32 to index
    %3 = memref.load %arg3[%2] : memref<8xi32, #tpu.memory_space<smem>>
    %c1_i32 = arith.constant 1 : i32
    %4 = arith.muli %3, %c1_i32 : i32
    %5 = arith.addi %4, %arg1 : i32
    %c0_i32 = arith.constant 0 : i32
    %c0_i32_0 = arith.constant 0 : i32
    %c0_i32_1 = arith.constant 0 : i32
    return %5, %c0_i32, %c0_i32_0 : i32, i32, i32
  }
  func.func @transform_2(%arg0: i32, %arg1: i32, %arg2: i32, %arg3: memref<8xi32, #tpu.memory_space<smem>>, %arg4: memref<2xi32, #tpu.memory_space<smem>>) -> (i32, i32, i32) {
    %c4_i32 = arith.constant 4 : i32
    %0 = arith.muli %arg0, %c4_i32 : i32
    %1 = arith.addi %0, %arg2 : i32
    %2 = arith.index_cast %1 : i32 to index
    %3 = memref.load %arg3[%2] : memref<8xi32, #tpu.memory_space<smem>>
    %c0_i32 = arith.constant 0 : i32
    %c0_i32_0 = arith.constant 0 : i32
    return %3, %arg1, %c0_i32 : i32, i32, i32
  }
  func.func @transform_3(%arg0: i32, %arg1: i32, %arg2: i32, %arg3: memref<8xi32, #tpu.memory_space<smem>>, %arg4: memref<2xi32, #tpu.memory_space<smem>>) -> (i32, i32, i32) {
    %c4_i32 = arith.constant 4 : i32
    %0 = arith.muli %arg0, %c4_i32 : i32
    %1 = arith.addi %0, %arg2 : i32
    %2 = arith.index_cast %1 : i32 to index
    %3 = memref.load %arg3[%2] : memref<8xi32, #tpu.memory_space<smem>>
    %c0_i32 = arith.constant 0 : i32
    %c0_i32_0 = arith.constant 0 : i32
    return %3, %arg0, %c0_i32 : i32, i32, i32
  }
  func.func @transform_4(%arg0: i32, %arg1: i32, %arg2: i32, %arg3: memref<8xi32, #tpu.memory_space<smem>>, %arg4: memref<2xi32, #tpu.memory_space<smem>>) -> (i32, i32) {
    %c0_i32 = arith.constant 0 : i32
    %c0_i32_0 = arith.constant 0 : i32
    return %arg0, %c0_i32 : i32, i32
  }
}

</mosaic_0001>

<llo_original>
// kernel: sigma_moe_forward.2
$region0: #{sigma_moe_forward.2}
  #allocation0 [shape = 'u32[]', space=smem, size = 0x4, offset = 0x4, fixed_abs, tag = 'smem constant byte address 0x4 - core index']
  #allocation1 [shape = 'u32[144,128]{1,0:T(1,128)}', space=vmem, size = 0x12000, scoped, tag = 'internal scratch']
  %s0 = inlined_call_operand.vmem [shape: f32[16,32], index: 0, kind: input, shape index: {}]
  %s1 = inlined_call_operand.vmem [shape: f32[32,128], index: 1, kind: input, shape index: {}]
  %s2 = inlined_call_operand.vmem [shape: f32[16,128], index: 2, kind: output, shape index: {}]
  %s3 = sld [smem:[#allocation0]]
  $region41: #{sigma_moe_forward.2} parent=0
    _
  %s5 = ssub.s32 1, %s3
  %s6 = scalar_select 0, %s5, %s3
  loop: start=0, step=1, limit=4
  $region2: #{sigma_moe_forward.2} parent=0 // loop_pre_header
    _
  $region3: #{sigma_moe_forward.2} parent=0 // loop_header
    %s8 = sphi 0, %s12
    %p9 = scmp.ge.s32.totalorder %s8, 4
    %s18 = sphi 0, %s20
    %s21 = sphi 0, %s18
    %s22 = sphi 0, %s21
    %s38 = sphi 0, %s22
    %s42 = sphi 0, %s42
    %s44 = sphi 0, %s42
    %s45 = sphi 0, %s44
    %s59 = sphi 0, %s45
    %s65 = sphi 0, %s67
    %s68 = sphi 0, %s65
    %s69 = sphi 0, %s68
    %s85 = sphi 0, %s69
  $region4: #{sigma_moe_forward.2} parent=0 // loop_header_branch
    %11 = sbr.rel (%p9) target = $region8
  $region5: #{sigma_moe_forward.2} parent=0 // loop_body
    %s13 = ssub.s32 %s8, 1
    %s14 = ssub.s32 %s8, 2
    %s15 = sadd.s32 %s8, 1
    %s16 = ssub.s32 %s8, %s15
    %p17 = scmp.eq.s32.totalorder %s16, 0
    %s19 = sadd.s32 %s18, 1
    %s20 = scalar_select %p17, %s18, %s19
    %p23 = pneg %p17
    %p24 = scmp.eq.s32.totalorder %s8, 1
    %p25 = por %p23, %p24
    %p26 = scmp.ne.s32.totalorder %s18, %s21
    %p27 = scmp.eq.s32.totalorder %s8, 0
    %p28 = por %p26, %p27
    %p29 = scmp.ne.s32.totalorder %s18, %s21
    %p30 = scmp.eq.s32.totalorder %s13, 1
    %p31 = por %p29, %p30
    %p32 = scmp.ne.s32.totalorder %s21, %s22
    %p33 = scmp.eq.s32.totalorder %s13, 0
    %p34 = por %p32, %p33
    %p35 = scmp.ne.s32.totalorder %s21, %s22
    %p36 = scmp.eq.s32.totalorder %s14, 1
    %p37 = por %p35, %p36
    %p39 = scmp.ne.s32.totalorder %s22, %s38
    %p40 = scmp.eq.s32.totalorder %s14, 0
    %p41 = por %p39, %p40
    %s43 = sadd.s32 %s42, 1
    %p46 = scmp.eq.s32.totalorder %s8, 1
    %p47 = scmp.ne.s32.totalorder %s42, %s44
    %p48 = scmp.eq.s32.totalorder %s8, 0
    %p49 = por %p47, %p48
    %p50 = scmp.ne.s32.totalorder %s42, %s44
    %p51 = scmp.eq.s32.totalorder %s13, 1
    %p52 = por %p50, %p51
    %p53 = scmp.ne.s32.totalorder %s44, %s45
    %p54 = scmp.eq.s32.totalorder %s13, 0
    %p55 = por %p53, %p54
    %p56 = scmp.ne.s32.totalorder %s44, %s45
    %p57 = scmp.eq.s32.totalorder %s14, 1
    %p58 = por %p56, %p57
    %p60 = scmp.ne.s32.totalorder %s45, %s59
    %p61 = scmp.eq.s32.totalorder %s14, 0
    %p62 = por %p60, %p61
    %s63 = ssub.s32 %s8, %s15
    %p64 = scmp.eq.s32.totalorder %s63, 0
    %s66 = sadd.s32 %s65, 1
    %s67 = scalar_select %p64, %s65, %s66
    %p70 = pneg %p64
    %p71 = scmp.eq.s32.totalorder %s8, 1
    %p72 = por %p70, %p71
    %p73 = scmp.ne.s32.totalorder %s65, %s68
    %p74 = scmp.eq.s32.totalorder %s8, 0
    %p75 = por %p73, %p74
    %p76 = scmp.ne.s32.totalorder %s65, %s68
    %p77 = scmp.eq.s32.totalorder %s13, 1
    %p78 = por %p76, %p77
    %p79 = scmp.ne.s32.totalorder %s68, %s69
    %p80 = scmp.eq.s32.totalorder %s13, 0
    %p81 = por %p79, %p80
    %p82 = scmp.ne.s32.totalorder %s68, %s69
    %p83 = scmp.eq.s32.totalorder %s14, 1
    %p84 = por %p82, %p83
    %p86 = scmp.ne.s32.totalorder %s69, %s85
    %p87 = scmp.eq.s32.totalorder %s14, 0
    %p88 = por %p86, %p87
    %p89 = scmp.le.s32.totalorder 1, %s8
    %p90 = scmp.lt.s32.totalorder %s8, 3
    %p91 = pnand %p89, %p90
    %p92 = pneg %p91
    // Predicated region
    $region9: #{sigma_moe_forward.2} parent=5 // pred_check
      _
    $region10: #{sigma_moe_forward.2} parent=5 // pred_check_branch
      %94 = sbr.rel (%p91) target = $region12
    $region11: #{sigma_moe_forward.2} parent=5 // pred_region
      %s95 = ssub.s32 %s8, 1
      // Predicated region
      $region13: #{sigma_moe_forward.2} parent=11 // pred_check
        %p96 = pneg %p55
      $region14: #{sigma_moe_forward.2} parent=11 // pred_check_branch
        %98 = sbr.rel (%p96) target = $region16
      $region15: #{sigma_moe_forward.2} parent=11 // pred_region
        _
      $region16: #{sigma_moe_forward.2} parent=11 // pred_fallthru
        _
    $region12: #{sigma_moe_forward.2} parent=5 // pred_fallthru
      _
    %p99 = scmp.lt.s32.totalorder %s8, 2
    // Predicated region
    $region17: #{sigma_moe_forward.2} parent=5 // pred_check
      %p100 = pneg %p99
    $region18: #{sigma_moe_forward.2} parent=5 // pred_check_branch
      %102 = sbr.rel (%p100) target = $region20
    $region19: #{sigma_moe_forward.2} parent=5 // pred_region
      // Predicated region
      $region21: #{sigma_moe_forward.2} parent=19 // pred_check
        %p103 = pneg %p28
      $region22: #{sigma_moe_forward.2} parent=19 // pred_check_branch
        %105 = sbr.rel (%p103) target = $region24
      $region23: #{sigma_moe_forward.2} parent=19 // pred_region
        %p106 = scmp.lt.s32.totalorder %s8, 1
        %s107 = scalar_select %p106, %s8, 1
        %s108 = smul.addr %s107, 8
        %s109 = scalar_lea.vmem %s0, %s108
      $region24: #{sigma_moe_forward.2} parent=19 // pred_fallthru
        _
    $region20: #{sigma_moe_forward.2} parent=5 // pred_fallthru
      _
    %p110 = scmp.le.s32.totalorder 1, %s8
    %p111 = scmp.lt.s32.totalorder %s8, 3
    %p112 = pnand %p110, %p111
    %p113 = pneg %p112
    // Predicated region
    $region25: #{sigma_moe_forward.2} parent=5 // pred_check
      _
    $region26: #{sigma_moe_forward.2} parent=5 // pred_check_branch
      %115 = sbr.rel (%p112) target = $region28
    $region27: #{sigma_moe_forward.2} parent=5 // pred_region
      %s116 = ssub.s32 %s8, 1
      %p117 = scmp.lt.s32.totalorder %s13, 1
      %s118 = scalar_select %p117, %s13, 1
      %s119 = smul.addr %s118, 8
      %s120 = scalar_lea.vmem %s0, %s119
      %p121 = pneg %p34
      %p122 = pneg %p31
      %p123 = pneg %p55
      %p124 = pneg %p52
      %p125 = pneg %p81
      %p126 = pneg %p78
      %p127 = scmp.lt.s32.totalorder %s13, 1
      %s128 = scalar_select %p127, %s13, 1
      %s129 = smul.addr %s128, 8
      %s130 = scalar_lea.vmem %s2, %s129
      %p131 = scmp.lt.s32.totalorder %s13, 1
      %s132 = scalar_select %p131, %s13, 1
      %s133 = smul.addr %s132, 8
      %s134 = scalar_lea.vmem %s0, %s133
      %p135 = scmp.lt.s32.totalorder %s13, 1
      %s136 = scalar_select %p135, %s13, 1
      %s137 = smul.addr %s136, 8
      %s138 = scalar_lea.vmem %s2, %s137
      %v139 = vld [vmem:[%s134] sm:$0xff]
      %v140 = vld [vmem:[%s1] sm:$0xff]
      %v141 = vld [vmem:[%s1 + $0x8] sm:$0xff]
      %v142 = vld [vmem:[%s1 + $0x10] sm:$0xff]
      %v143 = vld [vmem:[%s1 + $0x18] sm:$0xff]
      %vm144 = vcmask 261120
      %v146 = vsel %vm144, %v139, 0
      %148 = vmatprep.subr.mxu0 0.0
      %149 = vmatpush1.msra.mxu0 %v140
      %150 = vmatprep.subr.mxu0 0.0
      %151 = vmatpush1.msra.mxu0 %v141
      %152 = vmatprep.subr.mxu0 0.0
      %153 = vmatpush1.msra.mxu0 %v142
      %154 = vmatprep.subr.mxu0 0.0
      %155 = vmatpush1.msra.mxu0 %v143
      %156 = vmatprep.subr.mxu0 0.0
      %157 = vmatpush1.msra.mxu0 0.0
      %158 = vmatprep.subr.mxu0 0.0
      %159 = vmatpush1.msra.mxu0 0.0
      %160 = vmatprep.subr.mxu0 0.0
      %161 = vmatpush1.msra.mxu0 0.0
      %162 = vmatprep.subr.mxu0 0.0
      %163 = vmatpush1.msra.mxu0 0.0
      %164 = vmatprep.subr.mxu0 0.0
      %165 = vmatpush1.msra.mxu0 0.0
      %166 = vmatprep.subr.mxu0 0.0
      %167 = vmatpush1.msra.mxu0 0.0
      %168 = vmatprep.subr.mxu0 0.0
      %169 = vmatpush1.msra.mxu0 0.0
      %170 = vmatprep.subr.mxu0 0.0
      %171 = vmatpush1.msra.mxu0 0.0
      %172 = vmatprep.subr.mxu0 0.0
      %173 = vmatpush1.msra.mxu0 0.0
      %174 = vmatprep.subr.mxu0 0.0
      %175 = vmatpush1.msra.mxu0 0.0
      %176 = vmatprep.subr.mxu0 0.0
      %177 = vmatpush1.msra.mxu0 0.0
      %178 = vmatprep.subr.mxu0 0.0
      %179 = vmatpush1.msra.mxu0 0.0
      %180 = vmatprep.subr.mxu0 0.0
      %181 = vmatpush1.msra.mxu0 0.0
      %182 = vmatprep.subr.mxu0 0.0
      %183 = vmatpush1.msra.mxu0 0.0
      %184 = vmatprep.subr.mxu0 0.0
      %185 = vmatpush1.msra.mxu0 0.0
      %186 = vmatprep.subr.mxu0 0.0
      %187 = vmatpush1.msra.mxu0 0.0
      %188 = vmatprep.subr.mxu0 0.0
      %189 = vmatpush1.msra.mxu0 0.0
      %190 = vmatprep.subr.mxu0 0.0
      %191 = vmatpush1.msra.mxu0 0.0
      %192 = vmatprep.subr.mxu0 0.0
      %193 = vmatpush1.msra.mxu0 0.0
      %194 = vmatprep.subr.mxu0 0.0
      %195 = vmatpush1.msra.mxu0 0.0
      %196 = vmatprep.subr.mxu0 0.0
      %197 = vmatpush1.msra.mxu0 0.0
      %198 = vmatprep.subr.mxu0 0.0
      %199 = vmatpush1.msra.mxu0 0.0
      %200 = vmatprep.subr.mxu0 0.0
      %201 = vmatpush1.msra.mxu0 0.0
      %202 = vmatprep.subr.mxu0 0.0
      %203 = vmatpush1.msra.mxu0 0.0
      %204 = vmatprep.subr.mxu0 0.0
      %205 = vmatpush1.msra.mxu0 0.0
      %206 = vmatprep.subr.mxu0 0.0
      %207 = vmatpush1.msra.mxu0 0.0
      %208 = vmatprep.subr.mxu0 0.0
      %209 = vmatpush1.msra.mxu0 0.0
      %210 = vmatprep.subr.mxu0 0.0
      %211 = vmatpush1.msra.mxu0 0.0
      %212 = vmatprep.mubr.f32.mxu0 0.0
      %213 = vmatmul.mubr.f32.gmra.mrb[0].mxu0 %v146
      %v214 = vpop.f32.mrb[0].mxu0
      %v215 = vadd.f32 0.0, %v214
      %v216 = vpop.f32.mrb[0].mxu0
      %217 = vdwg.mxu0
      %v218 = vxor.u32 %v215, 2147483648
      %v219 = vmul.f32 %v218, 1.442695
      %v220 = vpow.pop %v219
      %v221 = vadd.f32 %v220, 1.0
      %v222 = vrcp.pop %v221
      %v223 = vmul.f32 1.0, %v222
      %224 = vst [vmem:[%s138] sm:$0xff] %v223
      %p225 = scmp.lt.s32.totalorder %s13, 1
      %s226 = scalar_select %p225, %s13, 1
      %s227 = smul.addr %s226, 8
      %s228 = scalar_lea.vmem %s2, %s227
      // Predicated region
      $region29: #{sigma_moe_forward.2} parent=27 // pred_check
        %p229 = pneg %p78
      $region30: #{sigma_moe_forward.2} parent=27 // pred_check_branch
        %231 = sbr.rel (%p229) target = $region32
      $region31: #{sigma_moe_forward.2} parent=27 // pred_region
        _
      $region32: #{sigma_moe_forward.2} parent=27 // pred_fallthru
        _
    $region28: #{sigma_moe_forward.2} parent=5 // pred_fallthru
      _
    %p232 = scmp.le.s32.totalorder 2, %s8
    // Predicated region
    $region33: #{sigma_moe_forward.2} parent=5 // pred_check
      %p233 = pneg %p232
    $region34: #{sigma_moe_forward.2} parent=5 // pred_check_branch
      %235 = sbr.rel (%p233) target = $region36
    $region35: #{sigma_moe_forward.2} parent=5 // pred_region
      %s236 = ssub.s32 %s8, 2
      // Predicated region
      $region37: #{sigma_moe_forward.2} parent=35 // pred_check
        %p237 = pneg %p84
      $region38: #{sigma_moe_forward.2} parent=35 // pred_check_branch
        %239 = sbr.rel (%p237) target = $region40
      $region39: #{sigma_moe_forward.2} parent=35 // pred_region
        %p240 = scmp.lt.s32.totalorder %s14, 1
        %s241 = scalar_select %p240, %s14, 1
        %s242 = smul.addr %s241, 8
        %s243 = scalar_lea.vmem %s2, %s242
      $region40: #{sigma_moe_forward.2} parent=35 // pred_fallthru
        _
    $region36: #{sigma_moe_forward.2} parent=5 // pred_fallthru
      _
  $region6: #{sigma_moe_forward.2} parent=0 // loop_footer
    %s12 = sadd.s32 1, %s8
  $region7: #{sigma_moe_forward.2} parent=0 // loop_footer_branch
    %7 = sbr.rel target = $region3
  $region8: #{sigma_moe_forward.2} parent=0 // loop_exit
    _

// kernel: sigma_moe_forward.3
$region0: #{sigma_moe_forward.3}
  #allocation0 [shape = 'u32[]', space=smem, size = 0x4, offset = 0x4, fixed_abs, tag = 'smem constant byte address 0x4 - core index']
  #allocation1 [shape = 'u32[144,128]{1,0:T(1,128)}', space=vmem, size = 0x12000, scoped, tag = 'internal scratch']
  #allocation2 [shape = 'f32[8,32]{1,0:T(8,128)}', space=vmem, size = 0x1000, scoped, tag = 'scratch operand']
  #allocation3 [shape = 's32[1]{0}', space=sflag, size = 0x4, scoped, tag = 'scoped memory for sigma_moe_forward.3']
  #allocation4 [shape = 'u8[512]{0}', space=smem, size = 0x200, scoped, tag = 'prefetched SMEM operand 0']
  #allocation5 [shape = 'u8[512]{0}', space=smem, size = 0x200, scoped, tag = 'prefetched SMEM operand 1']
  %s0 = inlined_call_operand.vmem [shape: s32[8], index: 0, kind: input, shape index: {}]
  %s1 = inlined_call_operand.vmem [shape: s32[2], index: 1, kind: input, shape index: {}]
  %s2 = inlined_call_operand.vmem [shape: f32[16,32], index: 2, kind: input, shape index: {}]
  %s3 = inlined_call_operand.vmem [shape: f32[4,32,64], index: 3, kind: input, shape index: {}]
  %s4 = inlined_call_operand.vmem [shape: f32[4,64,32], index: 4, kind: input, shape index: {}]
  %s5 = inlined_call_operand.vmem [shape: f32[4,16,1], index: 5, kind: input, shape index: {}]
  %s6 = inlined_call_operand.hbm [shape: f32[16,32], index: 6, kind: output, shape index: {}]
  %s7 = sld [smem:[#allocation0]]
  $region61: #{sigma_moe_forward.3} parent=0
    _
  %s9 = ssub.s32 1, %s7
  %s10 = scalar_select 0, %s9, %s7
  %s11 = sshll.u32 %s0, 4
  %s12 = int_to_ptr.vmem [resolvable:$true] %s11
  %14 = dma.vmem_to_smem %s12, 16, [#allocation4], [#allocation3]
  %s15 = sshll.u32 %s1, 4
  %s16 = int_to_ptr.vmem [resolvable:$true] %s15
  %18 = dma.vmem_to_smem %s16, 16, [#allocation5], [#allocation3]
  %19 = dma.done [#allocation3], 32
  %20 = sfence
  $region1: #{sigma_moe_forward.3} parent=0
    #allocation6 [shape = 'u8[8192]{0}', space=vmem, size = 0x2000, scoped, tag = 'output window, operand 0']
    #allocation7 [shape = 's32[2]{0}', space=sflag, size = 0x8, scoped, tag = 'scoped memory for sigma_moe_forward.3']
    %21 = vsyncpa [#allocation7], 0
    %s22 = scalar_lea.sflag [#allocation7], 1
    %23 = vsyncpa %s22, 0
    loop: start=0, step=1, limit=10
    $region2: #{sigma_moe_forward.3} parent=1 // loop_pre_header
      _
    $region3: #{sigma_moe_forward.3} parent=1 // loop_header
      %s25 = sphi 0, %s29
      %p26 = scmp.ge.s32.totalorder %s25, 10
      %s32 = sphi 0, %s51
      %s33 = sphi 0, %s47
      %s34 = sphi 0, %s43
      %s35 = sphi 0, %s32
      %s36 = sphi 0, %s33
      %s37 = sphi 0, %s34
      %s38 = sphi 0, %s35
      %s39 = sphi 0, %s36
      %s40 = sphi 0, %s37
      %s54 = sphi 0, %s56
      %s57 = sphi 0, %s54
      %s58 = sphi 0, %s57
      %s74 = sphi 0, %s58
      %s88 = sphi 0, %s90
      %s91 = sphi 0, %s88
      %s92 = sphi 0, %s91
      %s108 = sphi 0, %s92
      %s122 = sphi 0, %s124
      %s125 = sphi 0, %s122
      %s126 = sphi 0, %s125
      %s142 = sphi 0, %s126
      %s156 = sphi 0, %s158
      %s159 = sphi 0, %s156
      %s160 = sphi 0, %s159
      %s176 = sphi 0, %s160
      %s182 = sphi 0, %s184
      %s185 = sphi 0, %s182
      %s186 = sphi 0, %s185
      %s202 = sphi 0, %s186
    $region4: #{sigma_moe_forward.3} parent=1 // loop_header_branch
      %28 = sbr.rel (%p26) target = $region8
    $region5: #{sigma_moe_forward.3} parent=1 // loop_body
      %s30 = ssub.s32 %s25, 1
      %s31 = ssub.s32 %s25, 2
      %s41 = sadd.s32 1, %s34
      %p42 = scmp.ge.s32.totalorder %s41, 4
      %s43 = scalar_select %p42, 0, %s41
      %s44 = sadd.s32 1, %s33
      %s45 = scalar_select %p42, %s44, %s33
      %p46 = scmp.ge.s32.totalorder %s45, 1
      %s47 = scalar_select %p46, 0, %s45
      %s48 = sadd.s32 1, %s32
      %s49 = scalar_select %p46, %s48, %s32
      %p50 = scmp.ge.s32.totalorder %s49, 2
      %s51 = scalar_select %p50, 0, %s49
      %s52 = ssub.s32 %s32, %s51
      %p53 = scmp.eq.s32.totalorder %s52, 0
      %s55 = sadd.s32 %s54, 1
      %s56 = scalar_select %p53, %s54, %s55
      %p59 = pneg %p53
      %p60 = scmp.eq.s32.totalorder %s25, 7
      %p61 = por %p59, %p60
      %p62 = scmp.ne.s32.totalorder %s54, %s57
      %p63 = scmp.eq.s32.totalorder %s25, 0
      %p64 = por %p62, %p63
      %p65 = scmp.ne.s32.totalorder %s54, %s57
      %p66 = scmp.eq.s32.totalorder %s30, 7
      %p67 = por %p65, %p66
      %p68 = scmp.ne.s32.totalorder %s57, %s58
      %p69 = scmp.eq.s32.totalorder %s30, 0
      %p70 = por %p68, %p69
      %p71 = scmp.ne.s32.totalorder %s57, %s58
      %p72 = scmp.eq.s32.totalorder %s31, 7
      %p73 = por %p71, %p72
      %p75 = scmp.ne.s32.totalorder %s58, %s74
      %p76 = scmp.eq.s32.totalorder %s31, 0
      %p77 = por %p75, %p76
      %s78 = smul.u32 %s32, 4
      %s79 = sadd.s32 %s78, %s34
      %s80 = sld [smem:[#allocation4 + %s79]]
      %s81 = sadd.s32 %s80, %s33
      %s82 = smul.u32 %s51, 4
      %s83 = sadd.s32 %s82, %s43
      %s84 = sld [smem:[#allocation4 + %s83]]
      %s85 = sadd.s32 %s84, %s47
      %s86 = ssub.s32 %s81, %s85
      %p87 = scmp.eq.s32.totalorder %s86, 0
      %s89 = sadd.s32 %s88, 1
      %s90 = scalar_select %p87, %s88, %s89
      %p93 = pneg %p87
      %p94 = scmp.eq.s32.totalorder %s25, 7
      %p95 = por %p93, %p94
      %p96 = scmp.ne.s32.totalorder %s88, %s91
      %p97 = scmp.eq.s32.totalorder %s25, 0
      %p98 = por %p96, %p97
      %p99 = scmp.ne.s32.totalorder %s88, %s91
      %p100 = scmp.eq.s32.totalorder %s30, 7
      %p101 = por %p99, %p100
      %p102 = scmp.ne.s32.totalorder %s91, %s92
      %p103 = scmp.eq.s32.totalorder %s30, 0
      %p104 = por %p102, %p103
      %p105 = scmp.ne.s32.totalorder %s91, %s92
      %p106 = scmp.eq.s32.totalorder %s31, 7
      %p107 = por %p105, %p106
      %p109 = scmp.ne.s32.totalorder %s92, %s108
      %p110 = scmp.eq.s32.totalorder %s31, 0
      %p111 = por %p109, %p110
      %s112 = smul.u32 %s32, 4
      %s113 = sadd.s32 %s112, %s34
      %s114 = sld [smem:[#allocation4 + %s113]]
      %s115 = smul.u32 %s51, 4
      %s116 = sadd.s32 %s115, %s43
      %s117 = sld [smem:[#allocation4 + %s116]]
      %s118 = ssub.s32 %s114, %s117
      %s119 = ssub.s32 %s33, %s47
      %s120 = sor.u32 %s118, %s119
      %p121 = scmp.eq.s32.totalorder %s120, 0
      %s123 = sadd.s32 %s122, 1
      %s124 = scalar_select %p121, %s122, %s123
      %p127 = pneg %p121
      %p128 = scmp.eq.s32.totalorder %s25, 7
      %p129 = por %p127, %p128
      %p130 = scmp.ne.s32.totalorder %s122, %s125
      %p131 = scmp.eq.s32.totalorder %s25, 0
      %p132 = por %p130, %p131
      %p133 = scmp.ne.s32.totalorder %s122, %s125
      %p134 = scmp.eq.s32.totalorder %s30, 7
      %p135 = por %p133, %p134
      %p136 = scmp.ne.s32.totalorder %s125, %s126
      %p137 = scmp.eq.s32.totalorder %s30, 0
      %p138 = por %p136, %p137
      %p139 = scmp.ne.s32.totalorder %s125, %s126
      %p140 = scmp.eq.s32.totalorder %s31, 7
      %p141 = por %p139, %p140
      %p143 = scmp.ne.s32.totalorder %s126, %s142
      %p144 = scmp.eq.s32.totalorder %s31, 0
      %p145 = por %p143, %p144
      %s146 = smul.u32 %s32, 4
      %s147 = sadd.s32 %s146, %s34
      %s148 = sld [smem:[#allocation4 + %s147]]
      %s149 = smul.u32 %s51, 4
      %s150 = sadd.s32 %s149, %s43
      %s151 = sld [smem:[#allocation4 + %s150]]
      %s152 = ssub.s32 %s148, %s151
      %s153 = ssub.s32 %s32, %s51
      %s154 = sor.u32 %s152, %s153
      %p155 = scmp.eq.s32.totalorder %s154, 0
      %s157 = sadd.s32 %s156, 1
      %s158 = scalar_select %p155, %s156, %s157
      %p161 = pneg %p155
      %p162 = scmp.eq.s32.totalorder %s25, 7
      %p163 = por %p161, %p162
      %p164 = scmp.ne.s32.totalorder %s156, %s159
      %p165 = scmp.eq.s32.totalorder %s25, 0
      %p166 = por %p164, %p165
      %p167 = scmp.ne.s32.totalorder %s156, %s159
      %p168 = scmp.eq.s32.totalorder %s30, 7
      %p169 = por %p167, %p168
      %p170 = scmp.ne.s32.totalorder %s159, %s160
      %p171 = scmp.eq.s32.totalorder %s30, 0
      %p172 = por %p170, %p171
      %p173 = scmp.ne.s32.totalorder %s159, %s160
      %p174 = scmp.eq.s32.totalorder %s31, 7
      %p175 = por %p173, %p174
      %p177 = scmp.ne.s32.totalorder %s160, %s176
      %p178 = scmp.eq.s32.totalorder %s31, 0
      %p179 = por %p177, %p178
      %s180 = ssub.s32 %s32, %s51
      %p181 = scmp.eq.s32.totalorder %s180, 0
      %s183 = sadd.s32 %s182, 1
      %s184 = scalar_select %p181, %s182, %s183
      %p187 = pneg %p181
      %p188 = scmp.eq.s32.totalorder %s25, 7
      %p189 = por %p187, %p188
      %p190 = scmp.ne.s32.totalorder %s182, %s185
      %p191 = scmp.eq.s32.totalorder %s25, 0
      %p192 = por %p190, %p191
      %p193 = scmp.ne.s32.totalorder %s182, %s185
      %p194 = scmp.eq.s32.totalorder %s30, 7
      %p195 = por %p193, %p194
      %p196 = scmp.ne.s32.totalorder %s185, %s186
      %p197 = scmp.eq.s32.totalorder %s30, 0
      %p198 = por %p196, %p197
      %p199 = scmp.ne.s32.totalorder %s185, %s186
      %p200 = scmp.eq.s32.totalorder %s31, 7
      %p201 = por %p199, %p200
      %p203 = scmp.ne.s32.totalorder %s186, %s202
      %p204 = scmp.eq.s32.totalorder %s31, 0
      %p205 = por %p203, %p204
      %p206 = scmp.le.s32.totalorder 1, %s25
      %p207 = scmp.lt.s32.totalorder %s25, 9
      %p208 = pnand %p206, %p207
      %p209 = pneg %p208
      // Predicated region
      $region9: #{sigma_moe_forward.3} parent=5 // pred_check
        _
      $region10: #{sigma_moe_forward.3} parent=5 // pred_check_branch
        %211 = sbr.rel (%p208) target = $region12
      $region11: #{sigma_moe_forward.3} parent=5 // pred_region
        %s212 = ssub.s32 %s25, 1
      $region12: #{sigma_moe_forward.3} parent=5 // pred_fallthru
        _
      %p213 = scmp.lt.s32.totalorder %s25, 8
      // Predicated region
      $region13: #{sigma_moe_forward.3} parent=5 // pred_check
        %p214 = pneg %p213
      $region14: #{sigma_moe_forward.3} parent=5 // pred_check_branch
        %216 = sbr.rel (%p214) target = $region16
      $region15: #{sigma_moe_forward.3} parent=5 // pred_region
        // Predicated region
        $region17: #{sigma_moe_forward.3} parent=15 // pred_check
          %p217 = pneg %p64
        $region18: #{sigma_moe_forward.3} parent=15 // pred_check_branch
          %219 = sbr.rel (%p217) target = $region20
        $region19: #{sigma_moe_forward.3} parent=15 // pred_region
          %p220 = scmp.lt.s32.totalorder %s32, 1
          %s221 = scalar_select %p220, %s32, 1
          %s222 = smul.addr %s221, 8
          %s223 = scalar_lea.vmem %s2, %s222
        $region20: #{sigma_moe_forward.3} parent=15 // pred_fallthru
          _
        // Predicated region
        $region21: #{sigma_moe_forward.3} parent=15 // pred_check
          %p224 = pneg %p98
        $region22: #{sigma_moe_forward.3} parent=15 // pred_check_branch
          %226 = sbr.rel (%p224) target = $region24
        $region23: #{sigma_moe_forward.3} parent=15 // pred_region
          %s227 = smul.u32 %s32, 4
          %s228 = sadd.s32 %s227, %s34
          %s229 = sld [smem:[#allocation4 + %s228]]
          %s230 = sadd.s32 %s229, %s33
          %p231 = scmp.lt.s32.totalorder %s230, 3
          %s232 = scalar_select %p231, %s230, 3
          %s233 = smul.addr %s232, 4
          %s234 = smul.addr %s233, 8
          %s235 = scalar_lea.vmem %s3, %s234
          %s236 = smul.u32 %s32, 4
          %s237 = sadd.s32 %s236, %s34
          %s238 = sld [smem:[#allocation4 + %s237]]
          %s239 = sadd.s32 %s238, %s33
        $region24: #{sigma_moe_forward.3} parent=15 // pred_fallthru
          _
        // Predicated region
        $region25: #{sigma_moe_forward.3} parent=15 // pred_check
          %p240 = pneg %p132
        $region26: #{sigma_moe_forward.3} parent=15 // pred_check_branch
          %242 = sbr.rel (%p240) target = $region28
        $region27: #{sigma_moe_forward.3} parent=15 // pred_region
          %s243 = smul.u32 %s32, 4
          %s244 = sadd.s32 %s243, %s34
          %s245 = sld [smem:[#allocation4 + %s244]]
          %s246 = smul.u32 8, %s33
          %p247 = scmp.lt.s32.totalorder %s245, 3
          %s248 = scalar_select %p247, %s245, 3
          %p249 = scmp.lt.s32.totalorder %s246, 7
          %s250 = scalar_select %p249, %s246, 7
          %s251 = smul.addr %s248, 8
          %s252 = sadd.s32 %s250, %s251
          %s253 = smul.addr %s252, 8
          %s254 = scalar_lea.vmem %s4, %s253
          %s255 = smul.u32 %s32, 4
          %s256 = sadd.s32 %s255, %s34
          %s257 = sld [smem:[#allocation4 + %s256]]
          %s258 = smul.u32 8, %s33
        $region28: #{sigma_moe_forward.3} parent=15 // pred_fallthru
          _
        // Predicated region
        $region29: #{sigma_moe_forward.3} parent=15 // pred_check
          %p259 = pneg %p166
        $region30: #{sigma_moe_forward.3} parent=15 // pred_check_branch
          %261 = sbr.rel (%p259) target = $region32
        $region31: #{sigma_moe_forward.3} parent=15 // pred_region
          %s262 = smul.u32 %s32, 4
          %s263 = sadd.s32 %s262, %s34
          %s264 = sld [smem:[#allocation4 + %s263]]
          %p265 = scmp.lt.s32.totalorder %s264, 3
          %s266 = scalar_select %p265, %s264, 3
          %p267 = scmp.lt.s32.totalorder %s32, 1
          %s268 = scalar_select %p267, %s32, 1
          %s269 = smul.addr %s266, 2
          %s270 = sadd.s32 %s268, %s269
          %s271 = smul.addr %s270, 8
          %s272 = scalar_lea.vmem %s5, %s271
          %s273 = smul.u32 %s32, 4
          %s274 = sadd.s32 %s273, %s34
          %s275 = sld [smem:[#allocation4 + %s274]]
        $region32: #{sigma_moe_forward.3} parent=15 // pred_fallthru
          _
      $region16: #{sigma_moe_forward.3} parent=5 // pred_fallthru
        _
      %p276 = scmp.le.s32.totalorder 1, %s25
      %p277 = scmp.lt.s32.totalorder %s25, 9
      %p278 = pnand %p276, %p277
      %p279 = pneg %p278
      // Predicated region
      $region33: #{sigma_moe_forward.3} parent=5 // pred_check
        _
      $region34: #{sigma_moe_forward.3} parent=5 // pred_check_branch
        %281 = sbr.rel (%p278) target = $region36
      $region35: #{sigma_moe_forward.3} parent=5 // pred_region
        %s282 = ssub.s32 %s25, 1
        %p283 = scmp.lt.s32.totalorder %s35, 1
        %s284 = scalar_select %p283, %s35, 1
        %s285 = smul.addr %s284, 8
        %s286 = scalar_lea.vmem %s2, %s285
        %p287 = pneg %p70
        %p288 = pneg %p67
        %s289 = smul.u32 %s35, 4
        %s290 = sadd.s32 %s289, %s37
        %s291 = sld [smem:[#allocation4 + %s290]]
        %s292 = sadd.s32 %s291, %s36
        %p293 = scmp.lt.s32.totalorder %s292, 3
        %s294 = scalar_select %p293, %s292, 3
        %s295 = smul.addr %s294, 4
        %s296 = smul.addr %s295, 8
        %s297 = scalar_lea.vmem %s3, %s296
        %p298 = pneg %p104
        %p299 = pneg %p101
        %s300 = smul.u32 %s35, 4
        %s301 = sadd.s32 %s300, %s37
        %s302 = sld [smem:[#allocation4 + %s301]]
        %s303 = smul.u32 8, %s36
        %p304 = scmp.lt.s32.totalorder %s302, 3
        %s305 = scalar_select %p304, %s302, 3
        %p306 = scmp.lt.s32.totalorder %s303, 7
        %s307 = scalar_select %p306, %s303, 7
        %s308 = smul.addr %s305, 8
        %s309 = sadd.s32 %s307, %s308
        %s310 = smul.addr %s309, 8
        %s311 = scalar_lea.vmem %s4, %s310
        %p312 = pneg %p138
        %p313 = pneg %p135
        %s314 = smul.u32 %s35, 4
        %s315 = sadd.s32 %s314, %s37
        %s316 = sld [smem:[#allocation4 + %s315]]
        %p317 = scmp.lt.s32.totalorder %s316, 3
        %s318 = scalar_select %p317, %s316, 3
        %p319 = scmp.lt.s32.totalorder %s35, 1
        %s320 = scalar_select %p319, %s35, 1
        %s321 = smul.addr %s318, 2
        %s322 = sadd.s32 %s320, %s321
        %s323 = smul.addr %s322, 8
        %s324 = scalar_lea.vmem %s5, %s323
        %p325 = pneg %p172
        %p326 = pneg %p169
        %p327 = pneg %p198
        %p328 = pneg %p195
        %s329 = sand.u32 %s185, 1
        %s330 = scalar_lea.sflag [#allocation7], %s329
        %s331 = sand.u32 %s185, 1
        %s332 = smul.addr %s331, 8
        %s333 = scalar_lea.vmem [#allocation6], %s332
        %p334 = scmp.lt.s32.totalorder %s35, 1
        %s335 = scalar_select %p334, %s35, 1
        %s336 = smul.addr %s335, 8
        %s337 = scalar_lea.vmem %s2, %s336
        %s338 = smul.u32 %s35, 4
        %s339 = sadd.s32 %s338, %s37
        %s340 = sld [smem:[#allocation4 + %s339]]
        %s341 = sadd.s32 %s340, %s36
        %p342 = scmp.lt.s32.totalorder %s341, 3
        %s343 = scalar_select %p342, %s341, 3
        %s344 = smul.addr %s343, 4
        %s345 = smul.addr %s344, 8
        %s346 = scalar_lea.vmem %s3, %s345
        %s347 = smul.u32 %s35, 4
        %s348 = sadd.s32 %s347, %s37
        %s349 = sld [smem:[#allocation4 + %s348]]
        %s350 = sadd.s32 %s349, %s36
        %s351 = smul.u32 %s35, 4
        %s352 = sadd.s32 %s351, %s37
        %s353 = sld [smem:[#allocation4 + %s352]]
        %s354 = smul.u32 8, %s36
        %p355 = scmp.lt.s32.totalorder %s353, 3
        %s356 = scalar_select %p355, %s353, 3
        %p357 = scmp.lt.s32.totalorder %s354, 7
        %s358 = scalar_select %p357, %s354, 7
        %s359 = smul.addr %s356, 8
        %s360 = sadd.s32 %s358, %s359
        %s361 = smul.addr %s360, 8
        %s362 = scalar_lea.vmem %s4, %s361
        %s363 = smul.u32 %s35, 4
        %s364 = sadd.s32 %s363, %s37
        %s365 = sld [smem:[#allocation4 + %s364]]
        %s366 = smul.u32 8, %s36
        %s367 = smul.u32 %s35, 4
        %s368 = sadd.s32 %s367, %s37
        %s369 = sld [smem:[#allocation4 + %s368]]
        %p370 = scmp.lt.s32.totalorder %s369, 3
        %s371 = scalar_select %p370, %s369, 3
        %p372 = scmp.lt.s32.totalorder %s35, 1
        %s373 = scalar_select %p372, %s35, 1
        %s374 = smul.addr %s371, 2
        %s375 = sadd.s32 %s373, %s374
        %s376 = smul.addr %s375, 8
        %s377 = scalar_lea.vmem %s5, %s376
        %s378 = smul.u32 %s35, 4
        %s379 = sadd.s32 %s378, %s37
        %s380 = sld [smem:[#allocation4 + %s379]]
        %p381 = scmp.eq.s32.totalorder %s36, 0
        %p382 = scmp.eq.s32.totalorder %s37, 0
        %p383 = pnand %p381, %p382
        %p384 = pneg %p383
        // Predicated region
        $region37: #{sigma_moe_forward.3} parent=35 // pred_check
          _
        $region38: #{sigma_moe_forward.3} parent=35 // pred_check_branch
          %386 = sbr.rel (%p383) target = $region40
        $region39: #{sigma_moe_forward.3} parent=35 // pred_region
          %vm387 = vcmask 261120
          %388 = vst.msk [vmem:[#allocation2] sm:$0xff] %vm387, 0.0
        $region40: #{sigma_moe_forward.3} parent=35 // pred_fallthru
          _
        %s389 = sld [smem:[#allocation5 + %s35]]
        %p390 = scmp.lt.s32.totalorder %s37, %s389
        // Predicated region
        $region41: #{sigma_moe_forward.3} parent=35 // pred_check
          %p391 = pneg %p390
        $region42: #{sigma_moe_forward.3} parent=35 // pred_check_branch
          %393 = sbr.rel (%p391) target = $region44
        $region43: #{sigma_moe_forward.3} parent=35 // pred_region
          %v394 = vld [vmem:[%s337] sm:$0xff]
          %v395 = vld [vmem:[%s346] sm:$0xff]
          %v396 = vld [vmem:[%s346 + $0x8] sm:$0xff]
          %v397 = vld [vmem:[%s346 + $0x10] sm:$0xff]
          %v398 = vld [vmem:[%s346 + $0x18] sm:$0xff]
          %vm399 = vcmask 261120
          %v401 = vsel %vm399, %v394, 0
          %403 = vmatprep.subr.mxu0 0.0
          %404 = vmatpush1.msra.mxu0 %v395
          %405 = vmatprep.subr.mxu0 0.0
          %406 = vmatpush1.msra.mxu0 %v396
          %407 = vmatprep.subr.mxu0 0.0
          %408 = vmatpush1.msra.mxu0 %v397
          %409 = vmatprep.subr.mxu0 0.0
          %410 = vmatpush1.msra.mxu0 %v398
          %411 = vmatprep.subr.mxu0 0.0
          %412 = vmatpush1.msra.mxu0 0.0
          %413 = vmatprep.subr.mxu0 0.0
          %414 = vmatpush1.msra.mxu0 0.0
          %415 = vmatprep.subr.mxu0 0.0
          %416 = vmatpush1.msra.mxu0 0.0
          %417 = vmatprep.subr.mxu0 0.0
          %418 = vmatpush1.msra.mxu0 0.0
          %419 = vmatprep.subr.mxu0 0.0
          %420 = vmatpush1.msra.mxu0 0.0
          %421 = vmatprep.subr.mxu0 0.0
          %422 = vmatpush1.msra.mxu0 0.0
          %423 = vmatprep.subr.mxu0 0.0
          %424 = vmatpush1.msra.mxu0 0.0
          %425 = vmatprep.subr.mxu0 0.0
          %426 = vmatpush1.msra.mxu0 0.0
          %427 = vmatprep.subr.mxu0 0.0
          %428 = vmatpush1.msra.mxu0 0.0
          %429 = vmatprep.subr.mxu0 0.0
          %430 = vmatpush1.msra.mxu0 0.0
          %431 = vmatprep.subr.mxu0 0.0
          %432 = vmatpush1.msra.mxu0 0.0
          %433 = vmatprep.subr.mxu0 0.0
          %434 = vmatpush1.msra.mxu0 0.0
          %435 = vmatprep.subr.mxu0 0.0
          %436 = vmatpush1.msra.mxu0 0.0
          %437 = vmatprep.subr.mxu0 0.0
          %438 = vmatpush1.msra.mxu0 0.0
          %439 = vmatprep.subr.mxu0 0.0
          %440 = vmatpush1.msra.mxu0 0.0
          %441 = vmatprep.subr.mxu0 0.0
          %442 = vmatpush1.msra.mxu0 0.0
          %443 = vmatprep.subr.mxu0 0.0
          %444 = vmatpush1.msra.mxu0 0.0
          %445 = vmatprep.subr.mxu0 0.0
          %446 = vmatpush1.msra.mxu0 0.0
          %447 = vmatprep.subr.mxu0 0.0
          %448 = vmatpush1.msra.mxu0 0.0
          %449 = vmatprep.subr.mxu0 0.0
          %450 = vmatpush1.msra.mxu0 0.0
          %451 = vmatprep.subr.mxu0 0.0
          %452 = vmatpush1.msra.mxu0 0.0
          %453 = vmatprep.subr.mxu0 0.0
          %454 = vmatpush1.msra.mxu0 0.0
          %455 = vmatprep.subr.mxu0 0.0
          %456 = vmatpush1.msra.mxu0 0.0
          %457 = vmatprep.subr.mxu0 0.0
          %458 = vmatpush1.msra.mxu0 0.0
          %459 = vmatprep.subr.mxu0 0.0
          %460 = vmatpush1.msra.mxu0 0.0
          %461 = vmatprep.subr.mxu0 0.0
          %462 = vmatpush1.msra.mxu0 0.0
          %463 = vmatprep.subr.mxu0 0.0
          %464 = vmatpush1.msra.mxu0 0.0
          %465 = vmatprep.subr.mxu0 0.0
          %466 = vmatpush1.msra.mxu0 0.0
          %467 = vmatprep.mubr.f32.mxu0 0.0
          %468 = vmatmul.mubr.f32.gmra.mrb[0].mxu0 %v401
          %v469 = vpop.f32.mrb[0].mxu0
          %v470 = vadd.f32 0.0, %v469
          %v471 = vpop.f32.mrb[0].mxu0
          %472 = vdwg.mxu0
          %v473 = vmax.f32 %v470, 0.0
          %v474 = vld [vmem:[%s377] sm:$0xff]
          %476 = vset.pattern.permute.xlu0 0
          %477 = vperm.xlu0 %476, %v474
          %v478 = vpop.permute.xlu0 %477
          %v480 = vmul.f32 %v478, %v473
          %v481 = vld [vmem:[#allocation2] sm:$0xff]
          %v482 = vld [vmem:[%s362] sm:$0xff]
          %v483 = vld [vmem:[%s362 + $0x8] sm:$0xff]
          %v484 = vld [vmem:[%s362 + $0x10] sm:$0xff]
          %v485 = vld [vmem:[%s362 + $0x18] sm:$0xff]
          %v486 = vld [vmem:[%s362 + $0x20] sm:$0xff]
          %v487 = vld [vmem:[%s362 + $0x28] sm:$0xff]
          %v488 = vld [vmem:[%s362 + $0x30] sm:$0xff]
          %v489 = vld [vmem:[%s362 + $0x38] sm:$0xff]
          %vm490 = vcmask 523264
          %v492 = vsel %vm490, %v480, 0
          %494 = vmatprep.subr.mxu0 0.0
          %495 = vmatpush1.msra.mxu0 %v482
          %496 = vmatprep.subr.mxu0 0.0
          %497 = vmatpush1.msra.mxu0 %v483
          %498 = vmatprep.subr.mxu0 0.0
          %499 = vmatpush1.msra.mxu0 %v484
          %500 = vmatprep.subr.mxu0 0.0
          %501 = vmatpush1.msra.mxu0 %v485
          %502 = vmatprep.subr.mxu0 0.0
          %503 = vmatpush1.msra.mxu0 %v486
          %504 = vmatprep.subr.mxu0 0.0
          %505 = vmatpush1.msra.mxu0 %v487
          %506 = vmatprep.subr.mxu0 0.0
          %507 = vmatpush1.msra.mxu0 %v488
          %508 = vmatprep.subr.mxu0 0.0
          %509 = vmatpush1.msra.mxu0 %v489
          %510 = vmatprep.subr.mxu0 0.0
          %511 = vmatpush1.msra.mxu0 0.0
          %512 = vmatprep.subr.mxu0 0.0
          %513 = vmatpush1.msra.mxu0 0.0
          %514 = vmatprep.subr.mxu0 0.0
          %515 = vmatpush1.msra.mxu0 0.0
          %516 = vmatprep.subr.mxu0 0.0
          %517 = vmatpush1.msra.mxu0 0.0
          %518 = vmatprep.subr.mxu0 0.0
          %519 = vmatpush1.msra.mxu0 0.0
          %520 = vmatprep.subr.mxu0 0.0
          %521 = vmatpush1.msra.mxu0 0.0
          %522 = vmatprep.subr.mxu0 0.0
          %523 = vmatpush1.msra.mxu0 0.0
          %524 = vmatprep.subr.mxu0 0.0
          %525 = vmatpush1.msra.mxu0 0.0
          %526 = vmatprep.subr.mxu0 0.0
          %527 = vmatpush1.msra.mxu0 0.0
          %528 = vmatprep.subr.mxu0 0.0
          %529 = vmatpush1.msra.mxu0 0.0
          %530 = vmatprep.subr.mxu0 0.0
          %531 = vmatpush1.msra.mxu0 0.0
          %532 = vmatprep.subr.mxu0 0.0
          %533 = vmatpush1.msra.mxu0 0.0
          %534 = vmatprep.subr.mxu0 0.0
          %535 = vmatpush1.msra.mxu0 0.0
          %536 = vmatprep.subr.mxu0 0.0
          %537 = vmatpush1.msra.mxu0 0.0
          %538 = vmatprep.subr.mxu0 0.0
          %539 = vmatpush1.msra.mxu0 0.0
          %540 = vmatprep.subr.mxu0 0.0
          %541 = vmatpush1.msra.mxu0 0.0
          %542 = vmatprep.subr.mxu0 0.0
          %543 = vmatpush1.msra.mxu0 0.0
          %544 = vmatprep.subr.mxu0 0.0
          %545 = vmatpush1.msra.mxu0 0.0
          %546 = vmatprep.subr.mxu0 0.0
          %547 = vmatpush1.msra.mxu0 0.0
          %548 = vmatprep.subr.mxu0 0.0
          %549 = vmatpush1.msra.mxu0 0.0
          %550 = vmatprep.subr.mxu0 0.0
          %551 = vmatpush1.msra.mxu0 0.0
          %552 = vmatprep.subr.mxu0 0.0
          %553 = vmatpush1.msra.mxu0 0.0
          %554 = vmatprep.subr.mxu0 0.0
          %555 = vmatpush1.msra.mxu0 0.0
          %556 = vmatprep.subr.mxu0 0.0
          %557 = vmatpush1.msra.mxu0 0.0
          %558 = vmatprep.mubr.f32.mxu0 0.0
          %559 = vmatmul.mubr.f32.gmra.mrb[0].mxu0 %v492
          %v560 = vpop.f32.mrb[0].mxu0
          %v561 = vadd.f32 0.0, %v560
          %v562 = vpop.f32.mrb[0].mxu0
          %563 = vdwg.mxu0
          %v564 = vadd.f32 %v481, %v561
          %565 = vst.msk [vmem:[#allocation2] sm:$0xff] %vm399, %v564
        $region44: #{sigma_moe_forward.3} parent=35 // pred_fallthru
          _
        %p566 = scmp.eq.s32.totalorder %s37, 3
        %p567 = pnand %p381, %p566
        %p568 = pneg %p567
        // Predicated region
        $region45: #{sigma_moe_forward.3} parent=35 // pred_check
          _
        $region46: #{sigma_moe_forward.3} parent=35 // pred_check_branch
          %570 = sbr.rel (%p567) target = $region48
        $region47: #{sigma_moe_forward.3} parent=35 // pred_region
          %v571 = vld [vmem:[#allocation2] sm:$0xff]
          %vm572 = vcmask 261120
          %573 = vst.msk [vmem:[%s333] sm:$0xff] %vm572, %v571
        $region48: #{sigma_moe_forward.3} parent=35 // pred_fallthru
          _
        %s574 = sand.u32 %s185, 1
        %s575 = scalar_lea.sflag [#allocation7], %s574
        %s576 = sand.u32 %s185, 1
        %s577 = smul.addr %s576, 8
        %s578 = scalar_lea.vmem [#allocation6], %s577
        // Predicated region
        $region49: #{sigma_moe_forward.3} parent=35 // pred_check
          %p579 = pneg %p195
        $region50: #{sigma_moe_forward.3} parent=35 // pred_check_branch
          %581 = sbr.rel (%p579) target = $region52
        $region51: #{sigma_moe_forward.3} parent=35 // pred_region
          %s583 = ssub.s32 128, 128
          %584 = vsyncadd %s575, %s583
          %s585 = smul.addr %s35, 128
          %s586 = scalar_lea.hbm %s6, %s585
          %s588 = sshll.u32 %s578, 4
          %s589 = int_to_ptr.vmem [resolvable:$true] %s588
          %591 = dma.vmem_to_hbm [thread:$0]  %s589, 128, %s586, %s575
        $region52: #{sigma_moe_forward.3} parent=35 // pred_fallthru
          _
      $region36: #{sigma_moe_forward.3} parent=5 // pred_fallthru
        _
      %p592 = scmp.le.s32.totalorder 2, %s25
      // Predicated region
      $region53: #{sigma_moe_forward.3} parent=5 // pred_check
        %p593 = pneg %p592
      $region54: #{sigma_moe_forward.3} parent=5 // pred_check_branch
        %595 = sbr.rel (%p593) target = $region56
      $region55: #{sigma_moe_forward.3} parent=5 // pred_region
        %s596 = ssub.s32 %s25, 2
        // Predicated region
        $region57: #{sigma_moe_forward.3} parent=55 // pred_check
          %p597 = pneg %p201
        $region58: #{sigma_moe_forward.3} parent=55 // pred_check_branch
          %599 = sbr.rel (%p597) target = $region60
        $region59: #{sigma_moe_forward.3} parent=55 // pred_region
          %s600 = sand.u32 %s186, 1
          %s601 = scalar_lea.sflag [#allocation7], %s600
          %s602 = sand.u32 %s186, 1
          %s603 = smul.addr %s602, 8
          %s604 = scalar_lea.vmem [#allocation6], %s603
          %605 = dma.done %s601, 128
        $region60: #{sigma_moe_forward.3} parent=55 // pred_fallthru
          _
      $region56: #{sigma_moe_forward.3} parent=5 // pred_fallthru
        _
    $region6: #{sigma_moe_forward.3} parent=1 // loop_footer
      %s29 = sadd.s32 1, %s25
    $region7: #{sigma_moe_forward.3} parent=1 // loop_footer_branch
      %24 = sbr.rel target = $region3
    $region8: #{sigma_moe_forward.3} parent=1 // loop_exit
      _
    %606 = vsyncpa [#allocation7], 1
    %s607 = scalar_lea.sflag [#allocation7], 1
    %608 = vsyncpa %s607, 1

</llo_original>
